<compile_context>
chip_gen: v7x
topology: tpu7x:2x2x1
jax: 0.10.0
libtpu: 0.0.40
codegen_flags: <defaults>
</compile_context>

<pallas_src>
import functools
import math

import jax
import jax.numpy as jnp
from jax.experimental import pallas as pl
from jax.experimental.pallas import tpu as pltpu


# ---------------------------------------------------------------------------
# Kernel 0: feature projection  XW = X @ W  (lane-dense bf16 output)
# ---------------------------------------------------------------------------
def project_kernel(x_ref, w_ref, o_ref):
    o_ref[...] = jnp.dot(x_ref[...], w_ref[...],
                         preferred_element_type=jnp.float32).astype(o_ref.dtype)


# ---------------------------------------------------------------------------
# Kernel A: tiled aggregation with fused BN partial statistics
#   H_pre = A_hat @ XW  (bf16 out); per-row-block sum / sum-of-squares taken
#   from the f32 accumulator in the k == last epilogue.
# ---------------------------------------------------------------------------
def gcn_matmul_bnstats_kernel(a_ref, xw_ref, h_ref, sum_ref, ssq_ref, acc_ref):
    k = pl.program_id(1)

    @pl.when(k == 0)
    def _init():
        acc_ref[...] = jnp.zeros_like(acc_ref)

    # Single lane-dense dot per grid step (XW is precomputed / fused upstream).
    acc_ref[...] += jnp.dot(a_ref[...], xw_ref[...],
                            preferred_element_type=jnp.float32)

    @pl.when(k == pl.num_programs(1) - 1)
    def _finalize():
        acc = acc_ref[...]
        h_ref[...] = acc.astype(h_ref.dtype)
        nsub = sum_ref.shape[1]                           # 8 sublanes
        s = jnp.sum(acc, axis=0, keepdims=True)           # (1, hpad)
        q = jnp.sum(acc * acc, axis=0, keepdims=True)     # (1, hpad)
        # Row-block partials are written replicated across the 8 sublanes of the
        # stats block (sublane/lane-aligned store); the finalize kernel divides
        # the replication factor back out.
        sum_ref[0] = jnp.broadcast_to(s, (nsub, s.shape[1]))
        ssq_ref[0] = jnp.broadcast_to(q, (nsub, q.shape[1]))


# ---------------------------------------------------------------------------
# Kernel B: reduce per-block partial stats -> BN scale / shift (tiny, 1 step)
# ---------------------------------------------------------------------------
def bn_finalize_kernel(sum_ref, ssq_ref, g_ref, b_ref, scale_ref, shift_ref,
                       *, n_real, eps):
    nsub = sum_ref.shape[1]                    # replication factor (8)
    inv_n = 1.0 / (n_real * nsub)
    s = jnp.sum(jnp.sum(sum_ref[...], axis=0), axis=0, keepdims=True)   # (1, hpad)
    q = jnp.sum(jnp.sum(ssq_ref[...], axis=0), axis=0, keepdims=True)   # (1, hpad)
    mean = s * inv_n
    var = jnp.maximum(q * inv_n - mean * mean, 0.0)
    scale = g_ref[...] * jax.lax.rsqrt(var + eps)
    scale_ref[...] = scale
    shift_ref[...] = b_ref[...] - mean * scale


# ---------------------------------------------------------------------------
# Kernel C1: BN apply + PReLU + fused projection onto the NEXT layer's weights
# ---------------------------------------------------------------------------
def bn_prelu_project_kernel(h_ref, scale_ref, shift_ref, w_ref, alpha_ref, o_ref):
    h = h_ref[...].astype(jnp.float32) * scale_ref[...] + shift_ref[...]
    alpha = alpha_ref[0]
    h = jnp.where(h > 0, h, alpha * h)
    o_ref[...] = jnp.dot(h.astype(jnp.bfloat16), w_ref[...],
                         preferred_element_type=jnp.float32).astype(o_ref.dtype)


# ---------------------------------------------------------------------------
# Kernel C2: BN apply + PReLU (final layer)
# ---------------------------------------------------------------------------
def bn_prelu_kernel(h_ref, scale_ref, shift_ref, alpha_ref, o_ref):
    h = h_ref[...].astype(jnp.float32) * scale_ref[...] + shift_ref[...]
    alpha = alpha_ref[0]
    o_ref[...] = jnp.where(h > 0, h, alpha * h).astype(o_ref.dtype)


# ---------------------------------------------------------------------------
# Helpers.
# ---------------------------------------------------------------------------
def _round_up(v, m):
    return -(-v // m) * m


def _row_block(npad, target=1024):
    """Largest elementwise row block <= target that divides npad (multiple of 8)."""
    for cand in (target, 512, 256, 128, 64, 32, 16, 8):
        if cand <= npad and npad % cand == 0:
            return cand
    return npad


def _project(xin, w_p, te):
    npad, fin = xin.shape
    hpad = w_p.shape[1]
    return pl.pallas_call(
        project_kernel,
        out_shape=jax.ShapeDtypeStruct((npad, hpad), jnp.bfloat16),
        grid_spec=pltpu.PrefetchScalarGridSpec(
            num_scalar_prefetch=0,
            grid=(npad // te,),
            in_specs=[pl.BlockSpec((te, fin), lambda i: (i, 0)),
                      pl.BlockSpec((fin, hpad), lambda i: (0, 0))],
            out_specs=pl.BlockSpec((te, hpad), lambda i: (i, 0))),
        compiler_params=pltpu.CompilerParams(
            dimension_semantics=("parallel",)),
    )(xin, w_p)


# ---------------------------------------------------------------------------
# One GCNConv -> BN -> PReLU layer (+ optional fused projection onto W_next).
# ---------------------------------------------------------------------------
def _gcn_bn_prelu_layer(a_p, xw, g_p, be_p, alpha, *, n_real, tm, tk, te,
                        w_next=None, out_dtype=jnp.float32, eps=1e-5):
    npad = a_p.shape[0]
    hpad = xw.shape[1]
    nbi = npad // tm
    nbk = npad // tk

    # VMEM budget for the tile plan (double-buffered tiles + f32 accumulator),
    # clamped to 32 MiB so it stays well inside v7x's 64 MiB physical VMEM.
    tile_bytes = (2 * tm * tk * 2          # A_hat tiles (bf16, double buffered)
                  + 2 * tk * hpad * 2      # XW tiles
                  + 2 * tm * hpad * 2      # H_pre output tiles (bf16)
                  + tm * hpad * 4          # f32 accumulator
                  + 4 * 8 * hpad * 4)      # partial-stats blocks
    vmem_limit = int(min(max(2 * tile_bytes, 16 * 1024 * 1024), 32 * 1024 * 1024))

    cost = pl.CostEstimate(
        flops=int(2 * npad * npad * hpad),
        transcendentals=0,
        bytes_accessed=int(npad * npad * 2            # A_hat stream (bf16)
                           + nbi * npad * hpad * 2    # XW re-reads per row block
                           + npad * hpad * 2))        # H_pre writeback (bf16)

    # ---- A) tiled A_hat @ XW with fused BN partial statistics ----
    h_pre, sum_b, ssq_b = pl.pallas_call(
        gcn_matmul_bnstats_kernel,
        out_shape=(jax.ShapeDtypeStruct((npad, hpad), jnp.bfloat16),
                   jax.ShapeDtypeStruct((nbi, 8, hpad), jnp.float32),
                   jax.ShapeDtypeStruct((nbi, 8, hpad), jnp.float32)),
        grid_spec=pltpu.PrefetchScalarGridSpec(
            num_scalar_prefetch=0,
            grid=(nbi, nbk),
            in_specs=[pl.BlockSpec((tm, tk), lambda i, k: (i, k)),
                      pl.BlockSpec((tk, hpad), lambda i, k: (k, 0))],
            out_specs=[pl.BlockSpec((tm, hpad), lambda i, k: (i, 0)),
                       pl.BlockSpec((1, 8, hpad), lambda i, k: (i, 0, 0)),
                       pl.BlockSpec((1, 8, hpad), lambda i, k: (i, 0, 0))],
            scratch_shapes=[pltpu.VMEM((tm, hpad), jnp.float32)]),
        compiler_params=pltpu.CompilerParams(
            dimension_semantics=("parallel", "arbitrary"),
            vmem_limit_bytes=vmem_limit),
        cost_estimate=cost,
    )(a_p, xw)

    # ---- B) finalize BN statistics -> scale / shift (tiny) ----
    scale, shift = pl.pallas_call(
        functools.partial(bn_finalize_kernel, n_real=float(n_real), eps=eps),
        out_shape=(jax.ShapeDtypeStruct((1, hpad), jnp.float32),
                   jax.ShapeDtypeStruct((1, hpad), jnp.float32)),
        grid_spec=pltpu.PrefetchScalarGridSpec(
            num_scalar_prefetch=0,
            grid=(1,),
            in_specs=[pl.BlockSpec((nbi, 8, hpad), lambda i: (0, 0, 0)),
                      pl.BlockSpec((nbi, 8, hpad), lambda i: (0, 0, 0)),
                      pl.BlockSpec((1, hpad), lambda i: (0, 0)),
                      pl.BlockSpec((1, hpad), lambda i: (0, 0))],
            out_specs=[pl.BlockSpec((1, hpad), lambda i: (0, 0)),
                       pl.BlockSpec((1, hpad), lambda i: (0, 0))]),
    )(sum_b, ssq_b, g_p, be_p)

    # ---- C) BN apply + PReLU (+ fused projection onto next layer's weights) ----
    if w_next is not None:
        lpad = w_next.shape[1]
        return pl.pallas_call(
            bn_prelu_project_kernel,
            out_shape=jax.ShapeDtypeStruct((npad, lpad), jnp.bfloat16),
            grid_spec=pltpu.PrefetchScalarGridSpec(
                num_scalar_prefetch=0,
                grid=(npad // te,),
                in_specs=[pl.BlockSpec((te, hpad), lambda i: (i, 0)),
                          pl.BlockSpec((1, hpad), lambda i: (0, 0)),
                          pl.BlockSpec((1, hpad), lambda i: (0, 0)),
                          pl.BlockSpec((hpad, lpad), lambda i: (0, 0)),
                          pl.BlockSpec(memory_space=pltpu.MemorySpace.SMEM)],
                out_specs=pl.BlockSpec((te, lpad), lambda i: (i, 0))),
            compiler_params=pltpu.CompilerParams(
                dimension_semantics=("parallel",)),
        )(h_pre, scale, shift, w_next, alpha)

    return pl.pallas_call(
        bn_prelu_kernel,
        out_shape=jax.ShapeDtypeStruct((npad, hpad), out_dtype),
        grid_spec=pltpu.PrefetchScalarGridSpec(
            num_scalar_prefetch=0,
            grid=(npad // te,),
            in_specs=[pl.BlockSpec((te, hpad), lambda i: (i, 0)),
                      pl.BlockSpec((1, hpad), lambda i: (0, 0)),
                      pl.BlockSpec((1, hpad), lambda i: (0, 0)),
                      pl.BlockSpec(memory_space=pltpu.MemorySpace.SMEM)],
            out_specs=pl.BlockSpec((te, hpad), lambda i: (i, 0))),
        compiler_params=pltpu.CompilerParams(
            dimension_semantics=("parallel",)),
    )(h_pre, scale, shift, alpha)


# ---------------------------------------------------------------------------
# Encoder forward (wrapper: padding / dtype plumbing only).
# ---------------------------------------------------------------------------
def encoder_forward(a_hat, x, params, *, tm=512, tk=1024):
    (w1, b1, g1, be1, al1, w2, b2, g2, be2, al2) = params
    # GCNConv bias is a per-column constant added immediately before BatchNorm's
    # mean subtraction (batch-stats mode) -> exactly cancelled; dropped.
    del b1, b2

    n, f_in = x.shape
    hidden = w1.shape[1]
    latent = w2.shape[1]
    assert tm % 8 == 0 and tk % 128 == 0, "tm must be %8, tk must be %128"

    lane = 128
    hpad = _round_up(hidden, lane)
    lpad = _round_up(latent, lane)
    ntile = (tm * tk) // math.gcd(tm, tk)
    npad = _round_up(n, ntile)
    te = _row_block(npad)            # large elementwise row block, decoupled from tm

    # bf16 MXU operands (f32 accumulation in-kernel); zero padding keeps padded
    # rows/lanes exactly 0, so BN stats (divided by the real n) stay exact.
    # Padded A_hat is built directly in bf16 (no f32 npad^2 intermediate).
    a_p = jnp.pad(jnp.asarray(a_hat, jnp.float32).astype(jnp.bfloat16),
                  ((0, npad - n), (0, npad - n)))
    x_p = jnp.pad(jnp.asarray(x, jnp.float32).astype(jnp.bfloat16),
                  ((0, npad - n), (0, 0)))
    w1_p = jnp.pad(jnp.asarray(w1, jnp.float32).astype(jnp.bfloat16),
                   ((0, 0), (0, hpad - hidden)))
    w2_p = jnp.pad(jnp.asarray(w2, jnp.float32).astype(jnp.bfloat16),
                   ((0, hpad - hidden), (0, lpad - latent)))
    g1_p = jnp.pad(jnp.reshape(jnp.asarray(g1, jnp.float32), (1, -1)),
                   ((0, 0), (0, hpad - hidden)))
    be1_p = jnp.pad(jnp.reshape(jnp.asarray(be1, jnp.float32), (1, -1)),
                    ((0, 0), (0, hpad - hidden)))
    g2_p = jnp.pad(jnp.reshape(jnp.asarray(g2, jnp.float32), (1, -1)),
                   ((0, 0), (0, lpad - latent)))
    be2_p = jnp.pad(jnp.reshape(jnp.asarray(be2, jnp.float32), (1, -1)),
                    ((0, 0), (0, lpad - latent)))
    al1_s = jnp.asarray(al1, jnp.float32).reshape((1,))
    al2_s = jnp.asarray(al2, jnp.float32).reshape((1,))

    # Layer 1: project once, aggregate with fused BN stats, then BN+PReLU fused
    # with the projection onto W2 (h1 never round-trips HBM).
    xw1 = _project(x_p, w1_p, te)
    xw2 = _gcn_bn_prelu_layer(a_p, xw1, g1_p, be1_p, al1_s, n_real=n,
                              tm=tm, tk=tk, te=te, w_next=w2_p)
    # Layer 2: aggregate + BN + PReLU, f32 output.
    h2 = _gcn_bn_prelu_layer(a_p, xw2, g2_p, be2_p, al2_s, n_real=n,
                             tm=tm, tk=tk, te=te, out_dtype=jnp.float32)
    return h2[:n, :latent]


# ---------------------------------------------------------------------------
# Glue: dense GCN-normalized adjacency (A + I, symmetric D^-1/2 scaling).
# ---------------------------------------------------------------------------
def gcn_norm_dense(edge_index, num_nodes):
    src, dst = edge_index[0], edge_index[1]
    self_loops = jnp.arange(num_nodes, dtype=src.dtype)
    src = jnp.concatenate([src, self_loops])
    dst = jnp.concatenate([dst, self_loops])
    deg = jnp.zeros((num_nodes,), jnp.float32).at[dst].add(1.0)
    dinv = jax.lax.rsqrt(deg)
    w = dinv[src] * dinv[dst]
    # A_hat[target, source] so (A_hat @ X)[i] aggregates edges j->i.
    return jnp.zeros((num_nodes, num_nodes), jnp.float32).at[dst, src].add(w)


# ---------------------------------------------------------------------------
# References.
# ---------------------------------------------------------------------------
def encoder_ref_f32(a_hat, x, params, eps=1e-5):
    """Exact module semantics in f32 (bias included, batch-stats BN, PReLU)."""
    (w1, b1, g1, be1, al1, w2, b2, g2, be2, al2) = params

    def layer(h_in, w, b, g, be, al):
        h = a_hat @ (h_in @ w) + b
        mu = h.mean(axis=0, keepdims=True)
        var = ((h - mu) ** 2).mean(axis=0, keepdims=True)
        h = (h - mu) * jax.lax.rsqrt(var + eps) * jnp.reshape(g, (1, -1)) \
            + jnp.reshape(be, (1, -1))
        return jnp.where(h > 0, h, al * h)

    h = layer(x, w1, b1, g1, be1, al1)
    return layer(h, w2, b2, g2, be2, al2)


def encoder_ref_bf16(a_hat, x, params, eps=1e-5):
    """Mirrors kernel numerics: bf16 operands + bf16 H_pre storage, f32 stats."""
    (w1, b1, g1, be1, al1, w2, b2, g2, be2, al2) = params
    a_bf = a_hat.astype(jnp.bfloat16)

    def gcn_bn_prelu(xw_bf, g, be, al):
        h = jnp.dot(a_bf, xw_bf, preferred_element_type=jnp.float32)
        mu = h.mean(axis=0, keepdims=True)
        var = jnp.maximum((h * h).mean(axis=0, keepdims=True) - mu * mu, 0.0)
        scale = jnp.reshape(g, (1, -1)) * jax.lax.rsqrt(var + eps)
        shift = jnp.reshape(be, (1, -1)) - mu * scale
        hq = h.astype(jnp.bfloat16).astype(jnp.float32)      # bf16 H_pre storage
        hn = hq * scale + shift
        return jnp.where(hn > 0, hn, al * hn)

    xw1 = jnp.dot(x.astype(jnp.bfloat16), w1.astype(jnp.bfloat16),
                  preferred_element_type=jnp.float32).astype(jnp.bfloat16)
    h1 = gcn_bn_prelu(xw1, g1, be1, al1)
    xw2 = jnp.dot(h1.astype(jnp.bfloat16), w2.astype(jnp.bfloat16),
                  preferred_element_type=jnp.float32).astype(jnp.bfloat16)
    h2 = gcn_bn_prelu(xw2, g2, be2, al2)
    return h2.astype(jnp.float32)


# ---------------------------------------------------------------------------
# Test.
# ---------------------------------------------------------------------------
if __name__ == "__main__":
    N = 300
    input_dim = 16
    hidden_dim = 32
    latent_dim = 16

    key = jax.random.PRNGKey(0)
    kx, kw1, kw2, kb1, kb2, kg1, kg2, ke = jax.random.split(key, 8)

    x = jax.random.normal(kx, (N, input_dim), jnp.float32)

    # Deterministic symmetric graph: ring (both directions) + random chords.
    idx = jnp.arange(N)
    ring_src = jnp.concatenate([idx, (idx + 1) % N])
    ring_dst = jnp.concatenate([(idx + 1) % N, idx])
    extra_src = jax.random.randint(ke, (32,), 0, N)
    extra_dst = (extra_src + 7) % N
    edge_index = jnp.stack([
        jnp.concatenate([ring_src, extra_src, extra_dst]),
        jnp.concatenate([ring_dst, extra_dst, extra_src]),
    ]).astype(jnp.int32)

    a_hat = gcn_norm_dense(edge_index, N)

    def glorot(k, fi, fo):
        s = jnp.sqrt(6.0 / (fi + fo))
        return jax.random.uniform(k, (fi, fo), jnp.float32, -s, s)

    w1 = glorot(kw1, input_dim, hidden_dim)
    b1 = 0.1 * jax.random.normal(kb1, (1, hidden_dim), jnp.float32)
    g1 = 1.0 + 0.1 * jax.random.normal(kg1, (1, hidden_dim), jnp.float32)
    be1 = 0.1 * jax.random.normal(kg2, (1, hidden_dim), jnp.float32)
    al1 = jnp.full((1, 1), 0.25, jnp.float32)

    w2 = glorot(kw2, hidden_dim, latent_dim)
    b2 = 0.1 * jax.random.normal(kb2, (1, latent_dim), jnp.float32)
    g2 = jnp.ones((1, latent_dim), jnp.float32)
    be2 = jnp.zeros((1, latent_dim), jnp.float32)
    al2 = jnp.full((1, 1), 0.25, jnp.float32)

    params = (w1, b1, g1, be1, al1, w2, b2, g2, be2, al2)

    # Small tiles so the toy graph still exercises a multi-step (3, 3) grid.
    out = encoder_forward(a_hat, x, params, tm=128, tk=128)
    out = jax.block_until_ready(out)
    assert out.shape == (N, latent_dim)
    assert bool(jnp.all(jnp.isfinite(out)))

    # 1) Strict check against a reference that mirrors the kernel numerics.
    ref_match = encoder_ref_bf16(a_hat, x, params)
    err_match = float(jnp.max(jnp.abs(out - ref_match)))
    assert err_match < 2e-2, f"kernel vs numerics-matched reference: {err_match}"

    # 2) Module-semantics check vs exact f32 reference (bias included);
    #    tolerance reflects bf16 matmul operands / bf16 H_pre only.
    ref_f32 = encoder_ref_f32(a_hat, x, params)
    rel_err = float(jnp.linalg.norm(out - ref_f32) / jnp.linalg.norm(ref_f32))
    assert rel_err < 0.08, f"kernel vs f32 module reference (rel): {rel_err}"

    # 3) Smoke-test the default (large-tile, production) plan as well.
    out_big = encoder_forward(a_hat, x, params)      # tm=512, tk=1024, te=1024
    out_big = jax.block_until_ready(out_big)
    assert bool(jnp.all(jnp.isfinite(out_big)))
    err_big = float(jnp.max(jnp.abs(out_big - ref_match)))
    assert err_big < 2e-2, f"large-tile plan vs reference: {err_big}"

    print("KERNEL_OK")
</pallas_src>

<mosaic_0001>
module attributes {stable_mosaic.version = 11 : i64} {
  func.func @project_kernel(%arg0: i32, %arg1: memref<128x16xbf16, #tpu.memory_space<vmem>>, %arg2: memref<16x128xbf16, #tpu.memory_space<vmem>>, %arg3: memref<128x128xbf16, #tpu.memory_space<vmem>>) attributes {dimension_semantics = [#tpu.dimension_semantics<parallel>], iteration_bounds = array<i64: 3>, scalar_prefetch = 0 : i64, scratch_operands = 0 : i64, tpu.core_type = #tpu.core_type<tc>, window_params = [{transform_indices = @transform_0, window_bounds = array<i64: 128, 16>}, {pipeline_mode = #tpu.pipeline_mode<synchronous>, transform_indices = @transform_1, window_bounds = array<i64: 16, 128>}, {transform_indices = @transform_2, window_bounds = array<i64: 128, 128>}]} {
    %c0 = arith.constant 0 : index
    %c0_0 = arith.constant 0 : index
    %0 = vector.load %arg1[%c0, %c0_0] : memref<128x16xbf16, #tpu.memory_space<vmem>>, vector<128x16xbf16>
    %c0_1 = arith.constant 0 : index
    %c0_2 = arith.constant 0 : index
    %1 = vector.load %arg2[%c0_1, %c0_2] : memref<16x128xbf16, #tpu.memory_space<vmem>>, vector<16x128xbf16>
    %cst = arith.constant dense<0.000000e+00> : vector<128x128xf32>
    %2 = tpu.matmul %0, %1, %cst {dimension_numbers = #tpu.dot_dimension_numbers<[1], [0], [0], [1], [0, 0, 1, 1], [], []>} : vector<128x16xbf16>, vector<16x128xbf16>, vector<128x128xf32> -> vector<128x128xf32>
    %3 = arith.truncf %2 : vector<128x128xf32> to vector<128x128xbf16>
    %c0_3 = arith.constant 0 : index
    %c0_4 = arith.constant 0 : index
    %4 = vector.load %arg3[%c0_3, %c0_4] : memref<128x128xbf16, #tpu.memory_space<vmem>>, vector<128x128xbf16>
    tpu.vector_store %arg3[%c0_3, %c0_4], %3 {strides = array<i32>} : memref<128x128xbf16, #tpu.memory_space<vmem>>, vector<128x128xbf16>,
    return
  }
  func.func @transform_0(%arg0: i32) -> (i32, i32) {
    %c0_i32 = arith.constant 0 : i32
    %c0_i32_0 = arith.constant 0 : i32
    return %arg0, %c0_i32 : i32, i32
  }
  func.func @transform_1(%arg0: i32) -> (i32, i32) {
    %c0_i32 = arith.constant 0 : i32
    %c0_i32_0 = arith.constant 0 : i32
    %c0_i32_1 = arith.constant 0 : i32
    return %c0_i32, %c0_i32_0 : i32, i32
  }
  func.func @transform_2(%arg0: i32) -> (i32, i32) {
    %c0_i32 = arith.constant 0 : i32
    %c0_i32_0 = arith.constant 0 : i32
    return %arg0, %c0_i32 : i32, i32
  }
}

</mosaic_0001>

<llo_original>
// kernel: tpu_custom_call.1
$region0: #{tpu_custom_call.1}
  #allocation0 [shape = 'u32[]', space=smem, size = 0x4, offset = 0x4, fixed_abs, tag = 'smem constant byte address 0x4 - core index']
  #allocation1 [shape = 'u32[144,128]{1,0:T(1,128)}', space=vmem, size = 0x12000, scoped, tag = 'internal scratch']
  %s0 = inlined_call_operand.vmem [shape: bf16[384,16], index: 0, kind: input, shape index: {}]
  %s1 = inlined_call_operand.vmem [shape: bf16[16,128], index: 1, kind: input, shape index: {}]
  %s2 = inlined_call_operand.hbm [shape: bf16[384,128], index: 2, kind: output, shape index: {}]
  %s3 = sld [smem:[#allocation0]]
  $region41: #{tpu_custom_call.1} parent=0
    _
  %s5 = ssub.s32 1, %s3
  %s6 = scalar_select 0, %s5, %s3
  $region1: #{tpu_custom_call.1} parent=0
    #allocation2 [shape = 'u8[65536]{0}', space=vmem, size = 0x10000, scoped, tag = 'output window, operand 0']
    #allocation3 [shape = 's32[2]{0}', space=sflag, size = 0x8, scoped, tag = 'scoped memory for tpu_custom_call.1']
    %7 = vsyncpa [#allocation3], 0
    %s8 = scalar_lea.sflag [#allocation3], 1
    %9 = vsyncpa %s8, 0
    loop: start=0, step=1, limit=5
    $region2: #{tpu_custom_call.1} parent=1 // loop_pre_header
      _
    $region3: #{tpu_custom_call.1} parent=1 // loop_header
      %s11 = sphi 0, %s15
      %p12 = scmp.ge.s32.totalorder %s11, 5
      %s21 = sphi 0, %s23
      %s24 = sphi 0, %s21
      %s25 = sphi 0, %s24
      %s41 = sphi 0, %s25
      %s45 = sphi 0, %s45
      %s47 = sphi 0, %s45
      %s48 = sphi 0, %s47
      %s62 = sphi 0, %s48
      %s68 = sphi 0, %s70
      %s71 = sphi 0, %s68
      %s72 = sphi 0, %s71
      %s88 = sphi 0, %s72
    $region4: #{tpu_custom_call.1} parent=1 // loop_header_branch
      %14 = sbr.rel (%p12) target = $region8
    $region5: #{tpu_custom_call.1} parent=1 // loop_body
      %s16 = ssub.s32 %s11, 1
      %s17 = ssub.s32 %s11, 2
      %s18 = sadd.s32 %s11, 1
      %s19 = ssub.s32 %s11, %s18
      %p20 = scmp.eq.s32.totalorder %s19, 0
      %s22 = sadd.s32 %s21, 1
      %s23 = scalar_select %p20, %s21, %s22
      %p26 = pneg %p20
      %p27 = scmp.eq.s32.totalorder %s11, 2
      %p28 = por %p26, %p27
      %p29 = scmp.ne.s32.totalorder %s21, %s24
      %p30 = scmp.eq.s32.totalorder %s11, 0
      %p31 = por %p29, %p30
      %p32 = scmp.ne.s32.totalorder %s21, %s24
      %p33 = scmp.eq.s32.totalorder %s16, 2
      %p34 = por %p32, %p33
      %p35 = scmp.ne.s32.totalorder %s24, %s25
      %p36 = scmp.eq.s32.totalorder %s16, 0
      %p37 = por %p35, %p36
      %p38 = scmp.ne.s32.totalorder %s24, %s25
      %p39 = scmp.eq.s32.totalorder %s17, 2
      %p40 = por %p38, %p39
      %p42 = scmp.ne.s32.totalorder %s25, %s41
      %p43 = scmp.eq.s32.totalorder %s17, 0
      %p44 = por %p42, %p43
      %s46 = sadd.s32 %s45, 1
      %p49 = scmp.eq.s32.totalorder %s11, 2
      %p50 = scmp.ne.s32.totalorder %s45, %s47
      %p51 = scmp.eq.s32.totalorder %s11, 0
      %p52 = por %p50, %p51
      %p53 = scmp.ne.s32.totalorder %s45, %s47
      %p54 = scmp.eq.s32.totalorder %s16, 2
      %p55 = por %p53, %p54
      %p56 = scmp.ne.s32.totalorder %s47, %s48
      %p57 = scmp.eq.s32.totalorder %s16, 0
      %p58 = por %p56, %p57
      %p59 = scmp.ne.s32.totalorder %s47, %s48
      %p60 = scmp.eq.s32.totalorder %s17, 2
      %p61 = por %p59, %p60
      %p63 = scmp.ne.s32.totalorder %s48, %s62
      %p64 = scmp.eq.s32.totalorder %s17, 0
      %p65 = por %p63, %p64
      %s66 = ssub.s32 %s11, %s18
      %p67 = scmp.eq.s32.totalorder %s66, 0
      %s69 = sadd.s32 %s68, 1
      %s70 = scalar_select %p67, %s68, %s69
      %p73 = pneg %p67
      %p74 = scmp.eq.s32.totalorder %s11, 2
      %p75 = por %p73, %p74
      %p76 = scmp.ne.s32.totalorder %s68, %s71
      %p77 = scmp.eq.s32.totalorder %s11, 0
      %p78 = por %p76, %p77
      %p79 = scmp.ne.s32.totalorder %s68, %s71
      %p80 = scmp.eq.s32.totalorder %s16, 2
      %p81 = por %p79, %p80
      %p82 = scmp.ne.s32.totalorder %s71, %s72
      %p83 = scmp.eq.s32.totalorder %s16, 0
      %p84 = por %p82, %p83
      %p85 = scmp.ne.s32.totalorder %s71, %s72
      %p86 = scmp.eq.s32.totalorder %s17, 2
      %p87 = por %p85, %p86
      %p89 = scmp.ne.s32.totalorder %s72, %s88
      %p90 = scmp.eq.s32.totalorder %s17, 0
      %p91 = por %p89, %p90
      %p92 = scmp.le.s32.totalorder 1, %s11
      %p93 = scmp.lt.s32.totalorder %s11, 4
      %p94 = pnand %p92, %p93
      %p95 = pneg %p94
      // Predicated region
      $region9: #{tpu_custom_call.1} parent=5 // pred_check
        _
      $region10: #{tpu_custom_call.1} parent=5 // pred_check_branch
        %97 = sbr.rel (%p94) target = $region12
      $region11: #{tpu_custom_call.1} parent=5 // pred_region
        %s98 = ssub.s32 %s11, 1
        // Predicated region
        $region13: #{tpu_custom_call.1} parent=11 // pred_check
          %p99 = pneg %p58
        $region14: #{tpu_custom_call.1} parent=11 // pred_check_branch
          %101 = sbr.rel (%p99) target = $region16
        $region15: #{tpu_custom_call.1} parent=11 // pred_region
          _
        $region16: #{tpu_custom_call.1} parent=11 // pred_fallthru
          _
      $region12: #{tpu_custom_call.1} parent=5 // pred_fallthru
        _
      %p102 = scmp.lt.s32.totalorder %s11, 3
      // Predicated region
      $region17: #{tpu_custom_call.1} parent=5 // pred_check
        %p103 = pneg %p102
      $region18: #{tpu_custom_call.1} parent=5 // pred_check_branch
        %105 = sbr.rel (%p103) target = $region20
      $region19: #{tpu_custom_call.1} parent=5 // pred_region
        // Predicated region
        $region21: #{tpu_custom_call.1} parent=19 // pred_check
          %p106 = pneg %p31
        $region22: #{tpu_custom_call.1} parent=19 // pred_check_branch
          %108 = sbr.rel (%p106) target = $region24
        $region23: #{tpu_custom_call.1} parent=19 // pred_region
          %s109 = smul.u32 16, %s11
          %p110 = scmp.lt.s32.totalorder %s109, 47
          %s111 = scalar_select %p110, %s109, 47
          %s112 = smul.addr %s111, 4
          %s113 = scalar_lea.vmem %s0, %s112
          %s114 = smul.u32 16, %s11
        $region24: #{tpu_custom_call.1} parent=19 // pred_fallthru
          _
      $region20: #{tpu_custom_call.1} parent=5 // pred_fallthru
        _
      %p115 = scmp.le.s32.totalorder 1, %s11
      %p116 = scmp.lt.s32.totalorder %s11, 4
      %p117 = pnand %p115, %p116
      %p118 = pneg %p117
      // Predicated region
      $region25: #{tpu_custom_call.1} parent=5 // pred_check
        _
      $region26: #{tpu_custom_call.1} parent=5 // pred_check_branch
        %120 = sbr.rel (%p117) target = $region28
      $region27: #{tpu_custom_call.1} parent=5 // pred_region
        %s121 = ssub.s32 %s11, 1
        %s122 = smul.u32 16, %s16
        %p123 = scmp.lt.s32.totalorder %s122, 47
        %s124 = scalar_select %p123, %s122, 47
        %s125 = smul.addr %s124, 4
        %s126 = scalar_lea.vmem %s0, %s125
        %p127 = pneg %p37
        %p128 = pneg %p34
        %p129 = pneg %p58
        %p130 = pneg %p55
        %p131 = pneg %p84
        %p132 = pneg %p81
        %s133 = sand.u32 %s71, 1
        %s134 = scalar_lea.sflag [#allocation3], %s133
        %s135 = sand.u32 %s71, 1
        %s136 = smul.addr %s135, 64
        %s137 = scalar_lea.vmem [#allocation2], %s136
        %s138 = smul.u32 16, %s16
        %p139 = scmp.lt.s32.totalorder %s138, 47
        %s140 = scalar_select %p139, %s138, 47
        %s141 = smul.addr %s140, 4
        %s142 = scalar_lea.vmem %s0, %s141
        %s143 = smul.u32 16, %s16
        %s144 = smul.u32 16, %s16
        %v146 = vld [vmem:[%s142] sm:$0xf]
        %v147 = vld [vmem:[%s142 + $0x4] sm:$0xf]
        %v148 = vld [vmem:[%s142 + $0x8] sm:$0xf]
        %v149 = vld [vmem:[%s142 + $0xc] sm:$0xf]
        %v150 = vld [vmem:[%s142 + $0x10] sm:$0xf]
        %v151 = vld [vmem:[%s142 + $0x14] sm:$0xf]
        %v152 = vld [vmem:[%s142 + $0x18] sm:$0xf]
        %v153 = vld [vmem:[%s142 + $0x1c] sm:$0xf]
        %v154 = vld [vmem:[%s142 + $0x20] sm:$0xf]
        %v155 = vld [vmem:[%s142 + $0x24] sm:$0xf]
        %v156 = vld [vmem:[%s142 + $0x28] sm:$0xf]
        %v157 = vld [vmem:[%s142 + $0x2c] sm:$0xf]
        %v158 = vld [vmem:[%s142 + $0x30] sm:$0xf]
        %v159 = vld [vmem:[%s142 + $0x34] sm:$0xf]
        %v160 = vld [vmem:[%s142 + $0x38] sm:$0xf]
        %v161 = vld [vmem:[%s142 + $0x3c] sm:$0xf]
        %v162 = vld [vmem:[%s1] sm:$0xf]
        %v163 = vld [vmem:[%s1 + $0x4] sm:$0xf]
        %v180 = vunpack.c.l.b16 %v146
        %v181 = vunpack.c.l.b16 %v147
        %v182 = vunpack.c.l.b16 %v148
        %v183 = vunpack.c.l.b16 %v149
        %v184 = vunpack.c.l.b16 %v150
        %v185 = vunpack.c.l.b16 %v151
        %v186 = vunpack.c.l.b16 %v152
        %v187 = vunpack.c.l.b16 %v153
        %v188 = vunpack.c.l.b16 %v154
        %v189 = vunpack.c.l.b16 %v155
        %v190 = vunpack.c.l.b16 %v156
        %v191 = vunpack.c.l.b16 %v157
        %v192 = vunpack.c.l.b16 %v158
        %v193 = vunpack.c.l.b16 %v159
        %v194 = vunpack.c.l.b16 %v160
        %v195 = vunpack.c.l.b16 %v161
        %v196 = vpack.c.b16 %v181, %v180
        %v197 = vpack.c.b16 %v183, %v182
        %v198 = vpack.c.b16 %v185, %v184
        %v199 = vpack.c.b16 %v187, %v186
        %v200 = vpack.c.b16 %v189, %v188
        %v201 = vpack.c.b16 %v191, %v190
        %v202 = vpack.c.b16 %v193, %v192
        %v203 = vpack.c.b16 %v195, %v194
        %v206 = vunpack.c.l.b16 %v162
        %v207 = vunpack.c.l.b16 %v163
        %v208 = vpack.c.b16 %v207, %v206
        %vm210 = vcmask 130048
        %v212 = vsel %vm210, %v196, 0
        %v215 = vsel %vm210, %v197, 0
        %v218 = vsel %vm210, %v198, 0
        %v221 = vsel %vm210, %v199, 0
        %v224 = vsel %vm210, %v200, 0
        %v227 = vsel %vm210, %v201, 0
        %v230 = vsel %vm210, %v202, 0
        %v233 = vsel %vm210, %v203, 0
        %235 = vmatprep.subr.bf16.mxu0 0
        %236 = vmatpush1.bf16.msra.mxu0 %v208
        %237 = vmatprep.subr.bf16.mxu0 0
        %238 = vmatpush1.bf16.msra.mxu0 0
        %239 = vmatprep.subr.bf16.mxu0 0
        %240 = vmatpush1.bf16.msra.mxu0 0
        %241 = vmatprep.subr.bf16.mxu0 0
        %242 = vmatpush1.bf16.msra.mxu0 0
        %243 = vmatprep.subr.bf16.mxu0 0
        %244 = vmatpush1.bf16.msra.mxu0 0
        %245 = vmatprep.subr.bf16.mxu0 0
        %246 = vmatpush1.bf16.msra.mxu0 0
        %247 = vmatprep.subr.bf16.mxu0 0
        %248 = vmatpush1.bf16.msra.mxu0 0
        %249 = vmatprep.subr.bf16.mxu0 0
        %250 = vmatpush1.bf16.msra.mxu0 0
        %251 = vmatprep.subr.bf16.mxu0 0
        %252 = vmatpush1.bf16.msra.mxu0 0
        %253 = vmatprep.subr.bf16.mxu0 0
        %254 = vmatpush1.bf16.msra.mxu0 0
        %255 = vmatprep.subr.bf16.mxu0 0
        %256 = vmatpush1.bf16.msra.mxu0 0
        %257 = vmatprep.subr.bf16.mxu0 0
        %258 = vmatpush1.bf16.msra.mxu0 0
        %259 = vmatprep.subr.bf16.mxu0 0
        %260 = vmatpush1.bf16.msra.mxu0 0
        %261 = vmatprep.subr.bf16.mxu0 0
        %262 = vmatpush1.bf16.msra.mxu0 0
        %263 = vmatprep.subr.bf16.mxu0 0
        %264 = vmatpush1.bf16.msra.mxu0 0
        %265 = vmatprep.subr.bf16.mxu0 0
        %266 = vmatpush1.bf16.msra.mxu0 0
        %267 = vmatprep.mubr.bf16.mxu0 0
        %268 = vmatmul.mubr.bf16.gmra.mrb[0].mxu0 %v212
        %v269 = vpop.f32.mrb[0].mxu0
        %v270 = vadd.f32 0.0, %v269
        %v271 = vpop.f32.mrb[0].mxu0
        %v272 = vpop.f32.mrb[0].mxu0
        %v273 = vadd.f32 0.0, %v272
        %v274 = vpop.f32.mrb[0].mxu0
        %275 = vmatprep.mubr.bf16.mxu0 0
        %276 = vmatmul.mubr.bf16.gmra.mrb[0].mxu0 %v215
        %v277 = vpop.f32.mrb[0].mxu0
        %v278 = vadd.f32 0.0, %v277
        %v279 = vpop.f32.mrb[0].mxu0
        %v280 = vpop.f32.mrb[0].mxu0
        %v281 = vadd.f32 0.0, %v280
        %v282 = vpop.f32.mrb[0].mxu0
        %283 = vmatprep.mubr.bf16.mxu0 0
        %284 = vmatmul.mubr.bf16.gmra.mrb[0].mxu0 %v218
        %v285 = vpop.f32.mrb[0].mxu0
        %v286 = vadd.f32 0.0, %v285
        %v287 = vpop.f32.mrb[0].mxu0
        %v288 = vpop.f32.mrb[0].mxu0
        %v289 = vadd.f32 0.0, %v288
        %v290 = vpop.f32.mrb[0].mxu0
        %291 = vmatprep.mubr.bf16.mxu0 0
        %292 = vmatmul.mubr.bf16.gmra.mrb[0].mxu0 %v221
        %v293 = vpop.f32.mrb[0].mxu0
        %v294 = vadd.f32 0.0, %v293
        %v295 = vpop.f32.mrb[0].mxu0
        %v296 = vpop.f32.mrb[0].mxu0
        %v297 = vadd.f32 0.0, %v296
        %v298 = vpop.f32.mrb[0].mxu0
        %299 = vmatprep.mubr.bf16.mxu0 0
        %300 = vmatmul.mubr.bf16.gmra.mrb[0].mxu0 %v224
        %v301 = vpop.f32.mrb[0].mxu0
        %v302 = vadd.f32 0.0, %v301
        %v303 = vpop.f32.mrb[0].mxu0
        %v304 = vpop.f32.mrb[0].mxu0
        %v305 = vadd.f32 0.0, %v304
        %v306 = vpop.f32.mrb[0].mxu0
        %307 = vmatprep.mubr.bf16.mxu0 0
        %308 = vmatmul.mubr.bf16.gmra.mrb[0].mxu0 %v227
        %v309 = vpop.f32.mrb[0].mxu0
        %v310 = vadd.f32 0.0, %v309
        %v311 = vpop.f32.mrb[0].mxu0
        %v312 = vpop.f32.mrb[0].mxu0
        %v313 = vadd.f32 0.0, %v312
        %v314 = vpop.f32.mrb[0].mxu0
        %315 = vmatprep.mubr.bf16.mxu0 0
        %316 = vmatmul.mubr.bf16.gmra.mrb[0].mxu0 %v230
        %v317 = vpop.f32.mrb[0].mxu0
        %v318 = vadd.f32 0.0, %v317
        %v319 = vpop.f32.mrb[0].mxu0
        %v320 = vpop.f32.mrb[0].mxu0
        %v321 = vadd.f32 0.0, %v320
        %v322 = vpop.f32.mrb[0].mxu0
        %323 = vmatprep.mubr.bf16.mxu0 0
        %324 = vmatmul.mubr.bf16.gmra.mrb[0].mxu0 %v233
        %v325 = vpop.f32.mrb[0].mxu0
        %v326 = vadd.f32 0.0, %v325
        %v327 = vpop.f32.mrb[0].mxu0
        %v328 = vpop.f32.mrb[0].mxu0
        %v329 = vadd.f32 0.0, %v328
        %v330 = vpop.f32.mrb[0].mxu0
        %331 = vdwg.mxu0
        %v332 = vpack.c.bf16 %v273, %v270
        %v333 = vpack.c.bf16 %v281, %v278
        %v334 = vpack.c.bf16 %v289, %v286
        %v335 = vpack.c.bf16 %v297, %v294
        %v336 = vpack.c.bf16 %v305, %v302
        %v337 = vpack.c.bf16 %v313, %v310
        %v338 = vpack.c.bf16 %v321, %v318
        %v339 = vpack.c.bf16 %v329, %v326
        %v348 = vunpack.c.l.b16 %v332
        %v349 = vunpack.c.h.b16 %v332
        %v350 = vunpack.c.l.b16 %v333
        %v351 = vunpack.c.h.b16 %v333
        %v352 = vunpack.c.l.b16 %v334
        %v353 = vunpack.c.h.b16 %v334
        %v354 = vunpack.c.l.b16 %v335
        %v355 = vunpack.c.h.b16 %v335
        %v356 = vunpack.c.l.b16 %v336
        %v357 = vunpack.c.h.b16 %v336
        %v358 = vunpack.c.l.b16 %v337
        %v359 = vunpack.c.h.b16 %v337
        %v360 = vunpack.c.l.b16 %v338
        %v361 = vunpack.c.h.b16 %v338
        %v362 = vunpack.c.l.b16 %v339
        %v363 = vunpack.c.h.b16 %v339
        %v364 = vpack.c.b16 %v348, %v348
        %v365 = vpack.c.b16 %v349, %v349
        %v366 = vpack.c.b16 %v350, %v350
        %v367 = vpack.c.b16 %v351, %v351
        %v368 = vpack.c.b16 %v352, %v352
        %v369 = vpack.c.b16 %v353, %v353
        %v370 = vpack.c.b16 %v354, %v354
        %v371 = vpack.c.b16 %v355, %v355
        %v372 = vpack.c.b16 %v356, %v356
        %v373 = vpack.c.b16 %v357, %v357
        %v374 = vpack.c.b16 %v358, %v358
        %v375 = vpack.c.b16 %v359, %v359
        %v376 = vpack.c.b16 %v360, %v360
        %v377 = vpack.c.b16 %v361, %v361
        %v378 = vpack.c.b16 %v362, %v362
        %v379 = vpack.c.b16 %v363, %v363
        %396 = vst [vmem:[%s137] sm:$0xf] %v364
        %397 = vst [vmem:[%s137 + $0x4] sm:$0xf] %v365
        %398 = vst [vmem:[%s137 + $0x8] sm:$0xf] %v366
        %399 = vst [vmem:[%s137 + $0xc] sm:$0xf] %v367
        %400 = vst [vmem:[%s137 + $0x10] sm:$0xf] %v368
        %401 = vst [vmem:[%s137 + $0x14] sm:$0xf] %v369
        %402 = vst [vmem:[%s137 + $0x18] sm:$0xf] %v370
        %403 = vst [vmem:[%s137 + $0x1c] sm:$0xf] %v371
        %404 = vst [vmem:[%s137 + $0x20] sm:$0xf] %v372
        %405 = vst [vmem:[%s137 + $0x24] sm:$0xf] %v373
        %406 = vst [vmem:[%s137 + $0x28] sm:$0xf] %v374
        %407 = vst [vmem:[%s137 + $0x2c] sm:$0xf] %v375
        %408 = vst [vmem:[%s137 + $0x30] sm:$0xf] %v376
        %409 = vst [vmem:[%s137 + $0x34] sm:$0xf] %v377
        %410 = vst [vmem:[%s137 + $0x38] sm:$0xf] %v378
        %411 = vst [vmem:[%s137 + $0x3c] sm:$0xf] %v379
        %s412 = sand.u32 %s71, 1
        %s413 = scalar_lea.sflag [#allocation3], %s412
        %s414 = sand.u32 %s71, 1
        %s415 = smul.addr %s414, 64
        %s416 = scalar_lea.vmem [#allocation2], %s415
        // Predicated region
        $region29: #{tpu_custom_call.1} parent=27 // pred_check
          %p417 = pneg %p81
        $region30: #{tpu_custom_call.1} parent=27 // pred_check_branch
          %419 = sbr.rel (%p417) target = $region32
        $region31: #{tpu_custom_call.1} parent=27 // pred_region
          %s420 = smul.u32 16, %s16
          %s422 = ssub.s32 1024, 1024
          %423 = vsyncadd %s413, %s422
          %s424 = smul.addr %s420, 64
          %s425 = scalar_lea.hbm %s2, %s424
          %s426 = sshll.u32 %s416, 4
          %s427 = int_to_ptr.vmem [resolvable:$true] %s426
          %432 = dma.vmem_to_hbm [thread:$0]  %s427, 1024, %s425, %s413, 64, 64, 4
        $region32: #{tpu_custom_call.1} parent=27 // pred_fallthru
          _
      $region28: #{tpu_custom_call.1} parent=5 // pred_fallthru
        _
      %p433 = scmp.le.s32.totalorder 2, %s11
      // Predicated region
      $region33: #{tpu_custom_call.1} parent=5 // pred_check
        %p434 = pneg %p433
      $region34: #{tpu_custom_call.1} parent=5 // pred_check_branch
        %436 = sbr.rel (%p434) target = $region36
      $region35: #{tpu_custom_call.1} parent=5 // pred_region
        %s437 = ssub.s32 %s11, 2
        // Predicated region
        $region37: #{tpu_custom_call.1} parent=35 // pred_check
          %p438 = pneg %p87
        $region38: #{tpu_custom_call.1} parent=35 // pred_check_branch
          %440 = sbr.rel (%p438) target = $region40
        $region39: #{tpu_custom_call.1} parent=35 // pred_region
          %s441 = sand.u32 %s72, 1
          %s442 = scalar_lea.sflag [#allocation3], %s441
          %s443 = sand.u32 %s72, 1
          %s444 = smul.addr %s443, 64
          %s445 = scalar_lea.vmem [#allocation2], %s444
          %446 = dma.done %s442, 1024
        $region40: #{tpu_custom_call.1} parent=35 // pred_fallthru
          _
      $region36: #{tpu_custom_call.1} parent=5 // pred_fallthru
        _
    $region6: #{tpu_custom_call.1} parent=1 // loop_footer
      %s15 = sadd.s32 1, %s11
    $region7: #{tpu_custom_call.1} parent=1 // loop_footer_branch
      %10 = sbr.rel target = $region3
    $region8: #{tpu_custom_call.1} parent=1 // loop_exit
      _
    %447 = vsyncpa [#allocation3], 1
    %s448 = scalar_lea.sflag [#allocation3], 1
    %449 = vsyncpa %s448, 1

</llo_original>
